<compile_context>
chip_gen: v6e
topology: v6e:2x2x1
jax: 0.10.0
libtpu: 0.0.40
codegen_flags: <defaults>
</compile_context>

<pallas_src>
import functools

import jax
import jax.numpy as jnp
from jax.experimental import pallas as pl
from jax.experimental.pallas import tpu as pltpu

FEATURES = 2048
CLASSES = 200
LANES = 128
SUBLANES = 8


def _round_up(x, m):
    return ((x + m - 1) // m) * m


def _head_kernel(x_ref, w_ref, b_ref, o_ref, *, apply_softmax):
    """Single-shot fused linear + bias + softmax for one batch tile.

    x_ref: [TILE_B, 2048]   (features, streamed per grid step)
    w_ref: [2048, C_pad]    (weight, resident across grid)
    b_ref: [1, C_pad]       (bias, resident; padded columns are -inf)
    o_ref: [TILE_B, C_pad]
    """
    logits = jnp.dot(x_ref[...], w_ref[...], preferred_element_type=jnp.float32)
    logits = logits + b_ref[...]  # [TILE_B, C_pad] + [1, C_pad] broadcast
    if apply_softmax:
        m = jnp.max(logits, axis=-1, keepdims=True)
        e = jnp.exp(logits - m)  # padded classes: exp(-inf) == 0
        denom = jnp.sum(e, axis=-1, keepdims=True)
        # approx=True (EUP) is a few-% option but needs looser tolerances;
        # keep the exact reciprocal for f32 parity with the PyTorch head.
        out = e * pl.reciprocal(denom, approx=False)
    else:
        out = logits
    o_ref[...] = out.astype(o_ref.dtype)


def classifier_head(features, weight, bias, *, softmax=True, tile_b=128):
    """features: [B, 2048] f32, weight: [2048, C] f32, bias: [C] f32."""
    B, K = features.shape
    Kw, C = weight.shape
    assert K == Kw == FEATURES

    # --- Lane-dense class padding (200 -> 256). Padded weight cols are zero and
    #     padded bias entries are -inf so the softmax denominator is unchanged.
    c_pad = _round_up(C, LANES)
    if c_pad != C:
        weight = jnp.pad(weight, ((0, 0), (0, c_pad - C)))
        bias = jnp.pad(bias, (0, c_pad - C), constant_values=-jnp.inf)
    bias2d = bias.reshape(1, c_pad)

    # --- Batch tiling: tile must be a multiple of 8 (f32 sublane); pad batch
    #     to a whole number of tiles.
    tile_b = min(tile_b, _round_up(B, SUBLANES))
    tile_b = _round_up(tile_b, SUBLANES)
    b_pad = _round_up(B, tile_b)
    if b_pad != B:
        features = jnp.pad(features, ((0, b_pad - B), (0, 0)))

    kernel = functools.partial(_head_kernel, apply_softmax=softmax)

    out = pl.pallas_call(
        kernel,
        out_shape=jax.ShapeDtypeStruct((b_pad, c_pad), features.dtype),
        grid_spec=pltpu.PrefetchScalarGridSpec(
            num_scalar_prefetch=0,
            grid=(b_pad // tile_b,),
            in_specs=[
                pl.BlockSpec((tile_b, K), lambda i: (i, 0)),    # features: streamed
                pl.BlockSpec((K, c_pad), lambda i: (0, 0)),     # weight: resident
                pl.BlockSpec((1, c_pad), lambda i: (0, 0)),     # bias: resident
            ],
            out_specs=pl.BlockSpec((tile_b, c_pad), lambda i: (i, 0)),
        ),
        compiler_params=pltpu.CompilerParams(
            # Batch tiles are independent -> megacore-shardable on v7x.
            dimension_semantics=("parallel",),
        ),
    )(features, weight, bias2d)

    # Strip batch and class padding.
    return out[:B, :C]


def reference_head(features, weight, bias, *, softmax=True):
    logits = features @ weight + bias[None, :]
    if softmax:
        return jax.nn.softmax(logits, axis=-1)
    return logits


def init_params(key, in_features=FEATURES, classes=CLASSES):
    """Deterministic nn.Linear-style init: U(-1/sqrt(fan_in), 1/sqrt(fan_in))."""
    kw, kb = jax.random.split(key)
    bound = 1.0 / jnp.sqrt(jnp.float32(in_features))
    # Stored as [in, out] (transpose of PyTorch's [out, in]) for row-major matmul.
    weight = jax.random.uniform(
        kw, (in_features, classes), jnp.float32, minval=-bound, maxval=bound
    )
    bias = jax.random.uniform(
        kb, (classes,), jnp.float32, minval=-bound, maxval=bound
    )
    return weight, bias


if __name__ == "__main__":
    key = jax.random.PRNGKey(0)
    k_feat, k_param = jax.random.split(key)

    B = 8  # small batch
    # Backbone output features (resnet50 v1.5 global-pooled activations).
    features = jax.random.normal(k_feat, (B, FEATURES), jnp.float32)
    weight, bias = init_params(k_param)

    out = classifier_head(features, weight, bias, softmax=True)
    out = jax.block_until_ready(out)

    ref = reference_head(features, weight, bias, softmax=True)
    assert out.shape == (B, CLASSES)
    assert jnp.allclose(out, ref, atol=1e-5, rtol=1e-5), "mismatch vs reference"
    # rows of a softmax sum to one
    assert jnp.allclose(jnp.sum(out, axis=-1), jnp.ones((B,)), atol=1e-5)

    # also exercise the no-softmax path (module supports softmax=False)
    logits = jax.block_until_ready(classifier_head(features, weight, bias, softmax=False))
    assert jnp.allclose(logits, reference_head(features, weight, bias, softmax=False),
                        atol=1e-5, rtol=1e-5)

    print("KERNEL_OK")
</pallas_src>

<mosaic_0001>
module attributes {stable_mosaic.version = 11 : i64} {
  func.func @_head_kernel(%arg0: i32, %arg1: memref<8x2048xf32, #tpu.memory_space<vmem>>, %arg2: memref<2048x256xf32, #tpu.memory_space<vmem>>, %arg3: memref<1x256xf32, #tpu.memory_space<vmem>>, %arg4: memref<8x256xf32, #tpu.memory_space<vmem>>) attributes {dimension_semantics = [#tpu.dimension_semantics<parallel>], iteration_bounds = array<i64: 1>, scalar_prefetch = 0 : i64, scratch_operands = 0 : i64, tpu.core_type = #tpu.core_type<tc>, window_params = [{transform_indices = @transform_0, window_bounds = array<i64: 8, 2048>}, {pipeline_mode = #tpu.pipeline_mode<synchronous>, transform_indices = @transform_1, window_bounds = array<i64: 2048, 256>}, {pipeline_mode = #tpu.pipeline_mode<synchronous>, transform_indices = @transform_2, window_bounds = array<i64: 1, 256>}, {transform_indices = @transform_3, window_bounds = array<i64: 8, 256>}]} {
    %c0 = arith.constant 0 : index
    %c0_0 = arith.constant 0 : index
    %0 = vector.load %arg1[%c0, %c0_0] : memref<8x2048xf32, #tpu.memory_space<vmem>>, vector<8x2048xf32>
    %c0_1 = arith.constant 0 : index
    %c0_2 = arith.constant 0 : index
    %1 = vector.load %arg2[%c0_1, %c0_2] : memref<2048x256xf32, #tpu.memory_space<vmem>>, vector<2048x256xf32>
    %cst = arith.constant dense<0.000000e+00> : vector<8x256xf32>
    %2 = tpu.matmul %0, %1, %cst {dimension_numbers = #tpu.dot_dimension_numbers<[1], [0], [0], [1], [0, 0, 1, 1], [], []>} : vector<8x2048xf32>, vector<2048x256xf32>, vector<8x256xf32> -> vector<8x256xf32>
    %c0_3 = arith.constant 0 : index
    %c0_4 = arith.constant 0 : index
    %3 = vector.load %arg3[%c0_3, %c0_4] : memref<1x256xf32, #tpu.memory_space<vmem>>, vector<1x256xf32>
    %4 = vector.broadcast %3 : vector<1x256xf32> to vector<8x256xf32>
    %5 = arith.addf %2, %4 : vector<8x256xf32>
    %cst_5 = arith.constant dense<0xFF800000> : vector<8xf32>
    %6 = vector.multi_reduction <maximumf>, %5, %cst_5 [1] : vector<8x256xf32> to vector<8xf32>
    %7 = vector.shape_cast %6 : vector<8xf32> to vector<8x1xf32>
    %8 = vector.broadcast %7 : vector<8x1xf32> to vector<8x256xf32>
    %9 = arith.subf %5, %8 : vector<8x256xf32>
    %10 = math.exp %9 : vector<8x256xf32>
    %cst_6 = arith.constant dense<0.000000e+00> : vector<8xf32>
    %11 = vector.multi_reduction <add>, %10, %cst_6 [1] : vector<8x256xf32> to vector<8xf32>
    %12 = vector.shape_cast %11 : vector<8xf32> to vector<8x1xf32>
    %13 = tpu.reciprocal %12 : vector<8x1xf32> -> vector<8x1xf32>
    %14 = vector.broadcast %13 : vector<8x1xf32> to vector<8x256xf32>
    %15 = arith.mulf %10, %14 : vector<8x256xf32>
    %c0_7 = arith.constant 0 : index
    %c0_8 = arith.constant 0 : index
    %16 = vector.load %arg4[%c0_7, %c0_8] : memref<8x256xf32, #tpu.memory_space<vmem>>, vector<8x256xf32>
    tpu.vector_store %arg4[%c0_7, %c0_8], %15 {strides = array<i32>} : memref<8x256xf32, #tpu.memory_space<vmem>>, vector<8x256xf32>,
    return
  }
  func.func @transform_0(%arg0: i32) -> (i32, i32) {
    %c0_i32 = arith.constant 0 : i32
    %c0_i32_0 = arith.constant 0 : i32
    return %arg0, %c0_i32 : i32, i32
  }
  func.func @transform_1(%arg0: i32) -> (i32, i32) {
    %c0_i32 = arith.constant 0 : i32
    %c0_i32_0 = arith.constant 0 : i32
    %c0_i32_1 = arith.constant 0 : i32
    return %c0_i32, %c0_i32_0 : i32, i32
  }
  func.func @transform_2(%arg0: i32) -> (i32, i32) {
    %c0_i32 = arith.constant 0 : i32
    %c0_i32_0 = arith.constant 0 : i32
    %c0_i32_1 = arith.constant 0 : i32
    return %c0_i32, %c0_i32_0 : i32, i32
  }
  func.func @transform_3(%arg0: i32) -> (i32, i32) {
    %c0_i32 = arith.constant 0 : i32
    %c0_i32_0 = arith.constant 0 : i32
    return %arg0, %c0_i32 : i32, i32
  }
}

</mosaic_0001>

<llo_original>
// kernel: tpu_custom_call.1
$region0: #{tpu_custom_call.1}
  #allocation0 [shape = 'u32[]', space=smem, size = 0x4, offset = 0x4, fixed_abs, tag = 'smem constant byte address 0x4 - core index']
  #allocation1 [shape = 'u32[144,128]{1,0:T(1,128)}', space=vmem, size = 0x12000, scoped, tag = 'internal scratch']
  %s0 = inlined_call_operand.hbm [shape: f32[8,2048], index: 0, kind: input, shape index: {}]
  %s1 = inlined_call_operand.hbm [shape: f32[2048,256], index: 1, kind: input, shape index: {}]
  %s2 = inlined_call_operand.hbm [shape: f32[1,256], index: 2, kind: input, shape index: {}]
  %s3 = inlined_call_operand.hbm [shape: f32[8,256], index: 3, kind: output, shape index: {}]
  %s4 = sld [smem:[#allocation0]]
  $region34: #{tpu_custom_call.1} parent=0
    _
  %s6 = ssub.s32 1, %s4
  %s7 = scalar_select 0, %s6, %s4
  $region1: #{tpu_custom_call.1} parent=0
    #allocation2 [shape = 'u8[65536]{0}', space=vmem, size = 0x10000, scoped, tag = 'input window, operand 0, single buffered']
    #allocation3 [shape = 's32[1]{0}', space=sflag, size = 0x4, scoped, tag = 'scoped memory for tpu_custom_call.1']
    #allocation4 [shape = 's32[1]{0}', space=sflag, size = 0x4, scoped, tag = 'scoped memory for tpu_custom_call.1']
    #allocation5 [shape = 'u8[2097152]{0}', space=vmem, size = 0x200000, scoped, tag = 'input window, operand 1, single buffered']
    #allocation6 [shape = 's32[1]{0}', space=sflag, size = 0x4, scoped, tag = 'scoped memory for tpu_custom_call.1']
    #allocation7 [shape = 'u8[1024]{0}', space=vmem, size = 0x400, scoped, tag = 'input window, operand 2, single buffered']
    #allocation8 [shape = 'u8[8192]{0}', space=vmem, size = 0x2000, scoped, tag = 'output window, operand 0, single buffered']
    %8 = vsyncpa [#allocation3], 0
    %9 = vsyncpa [#allocation6], 0
    %10 = vsyncpa [#allocation4], 0
    // Predicated region
    $region2: #{tpu_custom_call.1} parent=1 // pred_check
      _
    $region3: #{tpu_custom_call.1} parent=1 // pred_check_branch
      %12 = sbr.rel (0) target = $region5
    $region4: #{tpu_custom_call.1} parent=1 // pred_region
      %s14 = ssub.s32 2048, 2048
      %15 = vsyncadd [#allocation3], %s14
      %s17 = sshll.u32 [#allocation2], 4
      %s18 = int_to_ptr.vmem [resolvable:$true] %s17
      %20 = dma.hbm_to_vmem [thread:$0]  %s0, 2048, %s18, [#allocation3]
    $region5: #{tpu_custom_call.1} parent=1 // pred_fallthru
      _
    // Predicated region
    $region6: #{tpu_custom_call.1} parent=1 // pred_check
      _
    $region7: #{tpu_custom_call.1} parent=1 // pred_check_branch
      %22 = sbr.rel (0) target = $region9
    $region8: #{tpu_custom_call.1} parent=1 // pred_region
      %s24 = ssub.s32 65536, 65536
      %25 = vsyncadd [#allocation6], %s24
      %s26 = sshll.u32 [#allocation5], 4
      %s27 = int_to_ptr.vmem [resolvable:$true] %s26
      %32 = dma.hbm_to_vmem [thread:$0]  %s1, 65536, %s27, [#allocation6], 256, 256, 16
    $region9: #{tpu_custom_call.1} parent=1 // pred_fallthru
      _
    // Predicated region
    $region10: #{tpu_custom_call.1} parent=1 // pred_check
      _
    $region11: #{tpu_custom_call.1} parent=1 // pred_check_branch
      %34 = sbr.rel (0) target = $region13
    $region12: #{tpu_custom_call.1} parent=1 // pred_region
      %s36 = ssub.s32 32, 32
      %37 = vsyncadd [#allocation6], %s36
      %s39 = sshll.u32 [#allocation7], 4
      %s40 = int_to_ptr.vmem [resolvable:$true] %s39
      %42 = dma.hbm_to_vmem [thread:$0]  %s2, 32, %s40, [#allocation6]
    $region13: #{tpu_custom_call.1} parent=1 // pred_fallthru
      _
    // Predicated region
    $region14: #{tpu_custom_call.1} parent=1 // pred_check
      _
    $region15: #{tpu_custom_call.1} parent=1 // pred_check_branch
      %44 = sbr.rel (0) target = $region17
    $region16: #{tpu_custom_call.1} parent=1 // pred_region
      %45 = dma.done [#allocation3], 2048
    $region17: #{tpu_custom_call.1} parent=1 // pred_fallthru
      _
    // Predicated region
    $region18: #{tpu_custom_call.1} parent=1 // pred_check
      _
    $region19: #{tpu_custom_call.1} parent=1 // pred_check_branch
      %47 = sbr.rel (0) target = $region21
    $region20: #{tpu_custom_call.1} parent=1 // pred_region
      %48 = dma.done [#allocation6], 65536
    $region21: #{tpu_custom_call.1} parent=1 // pred_fallthru
      _
    // Predicated region
    $region22: #{tpu_custom_call.1} parent=1 // pred_check
      _
    $region23: #{tpu_custom_call.1} parent=1 // pred_check_branch
      %50 = sbr.rel (0) target = $region25
    $region24: #{tpu_custom_call.1} parent=1 // pred_region
      %51 = dma.done [#allocation6], 32
    $region25: #{tpu_custom_call.1} parent=1 // pred_fallthru
      _
    %v52 = vld [vmem:[#allocation2] sm:$0xff]
    %v53 = vld [vmem:[#allocation2 + $0x8] sm:$0xff]
    %v54 = vld [vmem:[#allocation2 + $0x10] sm:$0xff]
    %v55 = vld [vmem:[#allocation2 + $0x18] sm:$0xff]
    %v56 = vld [vmem:[#allocation2 + $0x20] sm:$0xff]
    %v57 = vld [vmem:[#allocation2 + $0x28] sm:$0xff]
    %v58 = vld [vmem:[#allocation2 + $0x30] sm:$0xff]
    %v59 = vld [vmem:[#allocation2 + $0x38] sm:$0xff]
    %v60 = vld [vmem:[#allocation2 + $0x40] sm:$0xff]
    %v61 = vld [vmem:[#allocation2 + $0x48] sm:$0xff]
    %v62 = vld [vmem:[#allocation2 + $0x50] sm:$0xff]
    %v63 = vld [vmem:[#allocation2 + $0x58] sm:$0xff]
    %v64 = vld [vmem:[#allocation2 + $0x60] sm:$0xff]
    %v65 = vld [vmem:[#allocation2 + $0x68] sm:$0xff]
    %v66 = vld [vmem:[#allocation2 + $0x70] sm:$0xff]
    %v67 = vld [vmem:[#allocation2 + $0x78] sm:$0xff]
    %v68 = vld [vmem:[#allocation5] sm:$0xff]
    %v69 = vld [vmem:[#allocation5 + $0x8] sm:$0xff]
    %v70 = vld [vmem:[#allocation5 + $0x10] sm:$0xff]
    %v71 = vld [vmem:[#allocation5 + $0x18] sm:$0xff]
    %v72 = vld [vmem:[#allocation5 + $0x20] sm:$0xff]
    %v73 = vld [vmem:[#allocation5 + $0x28] sm:$0xff]
    %v74 = vld [vmem:[#allocation5 + $0x30] sm:$0xff]
    %v75 = vld [vmem:[#allocation5 + $0x38] sm:$0xff]
    %v76 = vld [vmem:[#allocation5 + $0x40] sm:$0xff]
    %v77 = vld [vmem:[#allocation5 + $0x48] sm:$0xff]
    %v78 = vld [vmem:[#allocation5 + $0x50] sm:$0xff]
    %v79 = vld [vmem:[#allocation5 + $0x58] sm:$0xff]
    %v80 = vld [vmem:[#allocation5 + $0x60] sm:$0xff]
    %v81 = vld [vmem:[#allocation5 + $0x68] sm:$0xff]
    %v82 = vld [vmem:[#allocation5 + $0x70] sm:$0xff]
    %v83 = vld [vmem:[#allocation5 + $0x78] sm:$0xff]
    %v84 = vld [vmem:[#allocation5 + $0x80] sm:$0xff]
    %v85 = vld [vmem:[#allocation5 + $0x88] sm:$0xff]
    %v86 = vld [vmem:[#allocation5 + $0x90] sm:$0xff]
    %v87 = vld [vmem:[#allocation5 + $0x98] sm:$0xff]
    %v88 = vld [vmem:[#allocation5 + $0xa0] sm:$0xff]
    %v89 = vld [vmem:[#allocation5 + $0xa8] sm:$0xff]
    %v90 = vld [vmem:[#allocation5 + $0xb0] sm:$0xff]
    %v91 = vld [vmem:[#allocation5 + $0xb8] sm:$0xff]
    %v92 = vld [vmem:[#allocation5 + $0xc0] sm:$0xff]
    %v93 = vld [vmem:[#allocation5 + $0xc8] sm:$0xff]
    %v94 = vld [vmem:[#allocation5 + $0xd0] sm:$0xff]
    %v95 = vld [vmem:[#allocation5 + $0xd8] sm:$0xff]
    %v96 = vld [vmem:[#allocation5 + $0xe0] sm:$0xff]
    %v97 = vld [vmem:[#allocation5 + $0xe8] sm:$0xff]
    %v98 = vld [vmem:[#allocation5 + $0xf0] sm:$0xff]
    %v99 = vld [vmem:[#allocation5 + $0xf8] sm:$0xff]
    %v100 = vld [vmem:[#allocation5 + $0x100] sm:$0xff]
    %v101 = vld [vmem:[#allocation5 + $0x108] sm:$0xff]
    %v102 = vld [vmem:[#allocation5 + $0x110] sm:$0xff]
    %v103 = vld [vmem:[#allocation5 + $0x118] sm:$0xff]
    %v104 = vld [vmem:[#allocation5 + $0x120] sm:$0xff]
    %v105 = vld [vmem:[#allocation5 + $0x128] sm:$0xff]
    %v106 = vld [vmem:[#allocation5 + $0x130] sm:$0xff]
    %v107 = vld [vmem:[#allocation5 + $0x138] sm:$0xff]
    %v108 = vld [vmem:[#allocation5 + $0x140] sm:$0xff]
    %v109 = vld [vmem:[#allocation5 + $0x148] sm:$0xff]
    %v110 = vld [vmem:[#allocation5 + $0x150] sm:$0xff]
    %v111 = vld [vmem:[#allocation5 + $0x158] sm:$0xff]
    %v112 = vld [vmem:[#allocation5 + $0x160] sm:$0xff]
    %v113 = vld [vmem:[#allocation5 + $0x168] sm:$0xff]
    %v114 = vld [vmem:[#allocation5 + $0x170] sm:$0xff]
    %v115 = vld [vmem:[#allocation5 + $0x178] sm:$0xff]
    %v116 = vld [vmem:[#allocation5 + $0x180] sm:$0xff]
    %v117 = vld [vmem:[#allocation5 + $0x188] sm:$0xff]
    %v118 = vld [vmem:[#allocation5 + $0x190] sm:$0xff]
    %v119 = vld [vmem:[#allocation5 + $0x198] sm:$0xff]
    %v120 = vld [vmem:[#allocation5 + $0x1a0] sm:$0xff]
    %v121 = vld [vmem:[#allocation5 + $0x1a8] sm:$0xff]
    %v122 = vld [vmem:[#allocation5 + $0x1b0] sm:$0xff]
    %v123 = vld [vmem:[#allocation5 + $0x1b8] sm:$0xff]
    %v124 = vld [vmem:[#allocation5 + $0x1c0] sm:$0xff]
    %v125 = vld [vmem:[#allocation5 + $0x1c8] sm:$0xff]
    %v126 = vld [vmem:[#allocation5 + $0x1d0] sm:$0xff]
    %v127 = vld [vmem:[#allocation5 + $0x1d8] sm:$0xff]
    %v128 = vld [vmem:[#allocation5 + $0x1e0] sm:$0xff]
    %v129 = vld [vmem:[#allocation5 + $0x1e8] sm:$0xff]
    %v130 = vld [vmem:[#allocation5 + $0x1f0] sm:$0xff]
    %v131 = vld [vmem:[#allocation5 + $0x1f8] sm:$0xff]
    %v132 = vld [vmem:[#allocation5 + $0x200] sm:$0xff]
    %v133 = vld [vmem:[#allocation5 + $0x208] sm:$0xff]
    %v134 = vld [vmem:[#allocation5 + $0x210] sm:$0xff]
    %v135 = vld [vmem:[#allocation5 + $0x218] sm:$0xff]
    %v136 = vld [vmem:[#allocation5 + $0x220] sm:$0xff]
    %v137 = vld [vmem:[#allocation5 + $0x228] sm:$0xff]
    %v138 = vld [vmem:[#allocation5 + $0x230] sm:$0xff]
    %v139 = vld [vmem:[#allocation5 + $0x238] sm:$0xff]
    %v140 = vld [vmem:[#allocation5 + $0x240] sm:$0xff]
    %v141 = vld [vmem:[#allocation5 + $0x248] sm:$0xff]
    %v142 = vld [vmem:[#allocation5 + $0x250] sm:$0xff]
    %v143 = vld [vmem:[#allocation5 + $0x258] sm:$0xff]
    %v144 = vld [vmem:[#allocation5 + $0x260] sm:$0xff]
    %v145 = vld [vmem:[#allocation5 + $0x268] sm:$0xff]
    %v146 = vld [vmem:[#allocation5 + $0x270] sm:$0xff]
    %v147 = vld [vmem:[#allocation5 + $0x278] sm:$0xff]
    %v148 = vld [vmem:[#allocation5 + $0x280] sm:$0xff]
    %v149 = vld [vmem:[#allocation5 + $0x288] sm:$0xff]
    %v150 = vld [vmem:[#allocation5 + $0x290] sm:$0xff]
    %v151 = vld [vmem:[#allocation5 + $0x298] sm:$0xff]
    %v152 = vld [vmem:[#allocation5 + $0x2a0] sm:$0xff]
    %v153 = vld [vmem:[#allocation5 + $0x2a8] sm:$0xff]
    %v154 = vld [vmem:[#allocation5 + $0x2b0] sm:$0xff]
    %v155 = vld [vmem:[#allocation5 + $0x2b8] sm:$0xff]
    %v156 = vld [vmem:[#allocation5 + $0x2c0] sm:$0xff]
    %v157 = vld [vmem:[#allocation5 + $0x2c8] sm:$0xff]
    %v158 = vld [vmem:[#allocation5 + $0x2d0] sm:$0xff]
    %v159 = vld [vmem:[#allocation5 + $0x2d8] sm:$0xff]
    %v160 = vld [vmem:[#allocation5 + $0x2e0] sm:$0xff]
    %v161 = vld [vmem:[#allocation5 + $0x2e8] sm:$0xff]
    %v162 = vld [vmem:[#allocation5 + $0x2f0] sm:$0xff]
    %v163 = vld [vmem:[#allocation5 + $0x2f8] sm:$0xff]
    %v164 = vld [vmem:[#allocation5 + $0x300] sm:$0xff]
    %v165 = vld [vmem:[#allocation5 + $0x308] sm:$0xff]
    %v166 = vld [vmem:[#allocation5 + $0x310] sm:$0xff]
    %v167 = vld [vmem:[#allocation5 + $0x318] sm:$0xff]
    %v168 = vld [vmem:[#allocation5 + $0x320] sm:$0xff]
    %v169 = vld [vmem:[#allocation5 + $0x328] sm:$0xff]
    %v170 = vld [vmem:[#allocation5 + $0x330] sm:$0xff]
    %v171 = vld [vmem:[#allocation5 + $0x338] sm:$0xff]
    %v172 = vld [vmem:[#allocation5 + $0x340] sm:$0xff]
    %v173 = vld [vmem:[#allocation5 + $0x348] sm:$0xff]
    %v174 = vld [vmem:[#allocation5 + $0x350] sm:$0xff]
    %v175 = vld [vmem:[#allocation5 + $0x358] sm:$0xff]
    %v176 = vld [vmem:[#allocation5 + $0x360] sm:$0xff]
    %v177 = vld [vmem:[#allocation5 + $0x368] sm:$0xff]
    %v178 = vld [vmem:[#allocation5 + $0x370] sm:$0xff]
    %v179 = vld [vmem:[#allocation5 + $0x378] sm:$0xff]
    %v180 = vld [vmem:[#allocation5 + $0x380] sm:$0xff]
    %v181 = vld [vmem:[#allocation5 + $0x388] sm:$0xff]
    %v182 = vld [vmem:[#allocation5 + $0x390] sm:$0xff]
    %v183 = vld [vmem:[#allocation5 + $0x398] sm:$0xff]
    %v184 = vld [vmem:[#allocation5 + $0x3a0] sm:$0xff]
    %v185 = vld [vmem:[#allocation5 + $0x3a8] sm:$0xff]
    %v186 = vld [vmem:[#allocation5 + $0x3b0] sm:$0xff]
    %v187 = vld [vmem:[#allocation5 + $0x3b8] sm:$0xff]
    %v188 = vld [vmem:[#allocation5 + $0x3c0] sm:$0xff]
    %v189 = vld [vmem:[#allocation5 + $0x3c8] sm:$0xff]
    %v190 = vld [vmem:[#allocation5 + $0x3d0] sm:$0xff]
    %v191 = vld [vmem:[#allocation5 + $0x3d8] sm:$0xff]
    %v192 = vld [vmem:[#allocation5 + $0x3e0] sm:$0xff]
    %v193 = vld [vmem:[#allocation5 + $0x3e8] sm:$0xff]
    %v194 = vld [vmem:[#allocation5 + $0x3f0] sm:$0xff]
    %v195 = vld [vmem:[#allocation5 + $0x3f8] sm:$0xff]
    %v196 = vld [vmem:[#allocation5 + $0x400] sm:$0xff]
    %v197 = vld [vmem:[#allocation5 + $0x408] sm:$0xff]
    %v198 = vld [vmem:[#allocation5 + $0x410] sm:$0xff]
    %v199 = vld [vmem:[#allocation5 + $0x418] sm:$0xff]
    %v200 = vld [vmem:[#allocation5 + $0x420] sm:$0xff]
    %v201 = vld [vmem:[#allocation5 + $0x428] sm:$0xff]
    %v202 = vld [vmem:[#allocation5 + $0x430] sm:$0xff]
    %v203 = vld [vmem:[#allocation5 + $0x438] sm:$0xff]
    %v204 = vld [vmem:[#allocation5 + $0x440] sm:$0xff]
    %v205 = vld [vmem:[#allocation5 + $0x448] sm:$0xff]
    %v206 = vld [vmem:[#allocation5 + $0x450] sm:$0xff]
    %v207 = vld [vmem:[#allocation5 + $0x458] sm:$0xff]
    %v208 = vld [vmem:[#allocation5 + $0x460] sm:$0xff]
    %v209 = vld [vmem:[#allocation5 + $0x468] sm:$0xff]
    %v210 = vld [vmem:[#allocation5 + $0x470] sm:$0xff]
    %v211 = vld [vmem:[#allocation5 + $0x478] sm:$0xff]
    %v212 = vld [vmem:[#allocation5 + $0x480] sm:$0xff]
    %v213 = vld [vmem:[#allocation5 + $0x488] sm:$0xff]
    %v214 = vld [vmem:[#allocation5 + $0x490] sm:$0xff]
    %v215 = vld [vmem:[#allocation5 + $0x498] sm:$0xff]
    %v216 = vld [vmem:[#allocation5 + $0x4a0] sm:$0xff]
    %v217 = vld [vmem:[#allocation5 + $0x4a8] sm:$0xff]
    %v218 = vld [vmem:[#allocation5 + $0x4b0] sm:$0xff]
    %v219 = vld [vmem:[#allocation5 + $0x4b8] sm:$0xff]
    %v220 = vld [vmem:[#allocation5 + $0x4c0] sm:$0xff]
    %v221 = vld [vmem:[#allocation5 + $0x4c8] sm:$0xff]
    %v222 = vld [vmem:[#allocation5 + $0x4d0] sm:$0xff]
    %v223 = vld [vmem:[#allocation5 + $0x4d8] sm:$0xff]
    %v224 = vld [vmem:[#allocation5 + $0x4e0] sm:$0xff]
    %v225 = vld [vmem:[#allocation5 + $0x4e8] sm:$0xff]
    %v226 = vld [vmem:[#allocation5 + $0x4f0] sm:$0xff]
    %v227 = vld [vmem:[#allocation5 + $0x4f8] sm:$0xff]
    %v228 = vld [vmem:[#allocation5 + $0x500] sm:$0xff]
    %v229 = vld [vmem:[#allocation5 + $0x508] sm:$0xff]
    %v230 = vld [vmem:[#allocation5 + $0x510] sm:$0xff]
    %v231 = vld [vmem:[#allocation5 + $0x518] sm:$0xff]
    %v232 = vld [vmem:[#allocation5 + $0x520] sm:$0xff]
    %v233 = vld [vmem:[#allocation5 + $0x528] sm:$0xff]
    %v234 = vld [vmem:[#allocation5 + $0x530] sm:$0xff]
    %v235 = vld [vmem:[#allocation5 + $0x538] sm:$0xff]
    %v236 = vld [vmem:[#allocation5 + $0x540] sm:$0xff]
    %v237 = vld [vmem:[#allocation5 + $0x548] sm:$0xff]
    %v238 = vld [vmem:[#allocation5 + $0x550] sm:$0xff]
    %v239 = vld [vmem:[#allocation5 + $0x558] sm:$0xff]
    %v240 = vld [vmem:[#allocation5 + $0x560] sm:$0xff]
    %v241 = vld [vmem:[#allocation5 + $0x568] sm:$0xff]
    %v242 = vld [vmem:[#allocation5 + $0x570] sm:$0xff]
    %v243 = vld [vmem:[#allocation5 + $0x578] sm:$0xff]
    %v244 = vld [vmem:[#allocation5 + $0x580] sm:$0xff]
    %v245 = vld [vmem:[#allocation5 + $0x588] sm:$0xff]
    %v246 = vld [vmem:[#allocation5 + $0x590] sm:$0xff]
    %v247 = vld [vmem:[#allocation5 + $0x598] sm:$0xff]
    %v248 = vld [vmem:[#allocation5 + $0x5a0] sm:$0xff]
    %v249 = vld [vmem:[#allocation5 + $0x5a8] sm:$0xff]
    %v250 = vld [vmem:[#allocation5 + $0x5b0] sm:$0xff]
    %v251 = vld [vmem:[#allocation5 + $0x5b8] sm:$0xff]
    %v252 = vld [vmem:[#allocation5 + $0x5c0] sm:$0xff]
    %v253 = vld [vmem:[#allocation5 + $0x5c8] sm:$0xff]
    %v254 = vld [vmem:[#allocation5 + $0x5d0] sm:$0xff]
    %v255 = vld [vmem:[#allocation5 + $0x5d8] sm:$0xff]
    %v256 = vld [vmem:[#allocation5 + $0x5e0] sm:$0xff]
    %v257 = vld [vmem:[#allocation5 + $0x5e8] sm:$0xff]
    %v258 = vld [vmem:[#allocation5 + $0x5f0] sm:$0xff]
    %v259 = vld [vmem:[#allocation5 + $0x5f8] sm:$0xff]
    %v260 = vld [vmem:[#allocation5 + $0x600] sm:$0xff]
    %v261 = vld [vmem:[#allocation5 + $0x608] sm:$0xff]
    %v262 = vld [vmem:[#allocation5 + $0x610] sm:$0xff]
    %v263 = vld [vmem:[#allocation5 + $0x618] sm:$0xff]
    %v264 = vld [vmem:[#allocation5 + $0x620] sm:$0xff]
    %v265 = vld [vmem:[#allocation5 + $0x628] sm:$0xff]
    %v266 = vld [vmem:[#allocation5 + $0x630] sm:$0xff]
    %v267 = vld [vmem:[#allocation5 + $0x638] sm:$0xff]
    %v268 = vld [vmem:[#allocation5 + $0x640] sm:$0xff]
    %v269 = vld [vmem:[#allocation5 + $0x648] sm:$0xff]
    %v270 = vld [vmem:[#allocation5 + $0x650] sm:$0xff]
    %v271 = vld [vmem:[#allocation5 + $0x658] sm:$0xff]
    %v272 = vld [vmem:[#allocation5 + $0x660] sm:$0xff]
    %v273 = vld [vmem:[#allocation5 + $0x668] sm:$0xff]
    %v274 = vld [vmem:[#allocation5 + $0x670] sm:$0xff]
    %v275 = vld [vmem:[#allocation5 + $0x678] sm:$0xff]
    %v276 = vld [vmem:[#allocation5 + $0x680] sm:$0xff]
    %v277 = vld [vmem:[#allocation5 + $0x688] sm:$0xff]
    %v278 = vld [vmem:[#allocation5 + $0x690] sm:$0xff]
    %v279 = vld [vmem:[#allocation5 + $0x698] sm:$0xff]
    %v280 = vld [vmem:[#allocation5 + $0x6a0] sm:$0xff]
    %v281 = vld [vmem:[#allocation5 + $0x6a8] sm:$0xff]
    %v282 = vld [vmem:[#allocation5 + $0x6b0] sm:$0xff]
    %v283 = vld [vmem:[#allocation5 + $0x6b8] sm:$0xff]
    %v284 = vld [vmem:[#allocation5 + $0x6c0] sm:$0xff]
    %v285 = vld [vmem:[#allocation5 + $0x6c8] sm:$0xff]
    %v286 = vld [vmem:[#allocation5 + $0x6d0] sm:$0xff]
    %v287 = vld [vmem:[#allocation5 + $0x6d8] sm:$0xff]
    %v288 = vld [vmem:[#allocation5 + $0x6e0] sm:$0xff]
    %v289 = vld [vmem:[#allocation5 + $0x6e8] sm:$0xff]
    %v290 = vld [vmem:[#allocation5 + $0x6f0] sm:$0xff]
    %v291 = vld [vmem:[#allocation5 + $0x6f8] sm:$0xff]
    %v292 = vld [vmem:[#allocation5 + $0x700] sm:$0xff]
    %v293 = vld [vmem:[#allocation5 + $0x708] sm:$0xff]
    %v294 = vld [vmem:[#allocation5 + $0x710] sm:$0xff]
    %v295 = vld [vmem:[#allocation5 + $0x718] sm:$0xff]
    %v296 = vld [vmem:[#allocation5 + $0x720] sm:$0xff]
    %v297 = vld [vmem:[#allocation5 + $0x728] sm:$0xff]
    %v298 = vld [vmem:[#allocation5 + $0x730] sm:$0xff]
    %v299 = vld [vmem:[#allocation5 + $0x738] sm:$0xff]
    %v300 = vld [vmem:[#allocation5 + $0x740] sm:$0xff]
    %v301 = vld [vmem:[#allocation5 + $0x748] sm:$0xff]
    %v302 = vld [vmem:[#allocation5 + $0x750] sm:$0xff]
    %v303 = vld [vmem:[#allocation5 + $0x758] sm:$0xff]
    %v304 = vld [vmem:[#allocation5 + $0x760] sm:$0xff]
    %v305 = vld [vmem:[#allocation5 + $0x768] sm:$0xff]
    %v306 = vld [vmem:[#allocation5 + $0x770] sm:$0xff]
    %v307 = vld [vmem:[#allocation5 + $0x778] sm:$0xff]
    %v308 = vld [vmem:[#allocation5 + $0x780] sm:$0xff]
    %v309 = vld [vmem:[#allocation5 + $0x788] sm:$0xff]
    %v310 = vld [vmem:[#allocation5 + $0x790] sm:$0xff]
    %v311 = vld [vmem:[#allocation5 + $0x798] sm:$0xff]
    %v312 = vld [vmem:[#allocation5 + $0x7a0] sm:$0xff]
    %v313 = vld [vmem:[#allocation5 + $0x7a8] sm:$0xff]
    %v314 = vld [vmem:[#allocation5 + $0x7b0] sm:$0xff]
    %v315 = vld [vmem:[#allocation5 + $0x7b8] sm:$0xff]
    %v316 = vld [vmem:[#allocation5 + $0x7c0] sm:$0xff]
    %v317 = vld [vmem:[#allocation5 + $0x7c8] sm:$0xff]
    %v318 = vld [vmem:[#allocation5 + $0x7d0] sm:$0xff]
    %v319 = vld [vmem:[#allocation5 + $0x7d8] sm:$0xff]
    %v320 = vld [vmem:[#allocation5 + $0x7e0] sm:$0xff]
    %v321 = vld [vmem:[#allocation5 + $0x7e8] sm:$0xff]
    %v322 = vld [vmem:[#allocation5 + $0x7f0] sm:$0xff]
    %v323 = vld [vmem:[#allocation5 + $0x7f8] sm:$0xff]
    %v324 = vld [vmem:[#allocation5 + $0x800] sm:$0xff]
    %v325 = vld [vmem:[#allocation5 + $0x808] sm:$0xff]
    %v326 = vld [vmem:[#allocation5 + $0x810] sm:$0xff]
    %v327 = vld [vmem:[#allocation5 + $0x818] sm:$0xff]
    %v328 = vld [vmem:[#allocation5 + $0x820] sm:$0xff]
    %v329 = vld [vmem:[#allocation5 + $0x828] sm:$0xff]
    %v330 = vld [vmem:[#allocation5 + $0x830] sm:$0xff]
    %v331 = vld [vmem:[#allocation5 + $0x838] sm:$0xff]
    %v332 = vld [vmem:[#allocation5 + $0x840] sm:$0xff]
    %v333 = vld [vmem:[#allocation5 + $0x848] sm:$0xff]
    %v334 = vld [vmem:[#allocation5 + $0x850] sm:$0xff]
    %v335 = vld [vmem:[#allocation5 + $0x858] sm:$0xff]
    %v336 = vld [vmem:[#allocation5 + $0x860] sm:$0xff]
    %v337 = vld [vmem:[#allocation5 + $0x868] sm:$0xff]
    %v338 = vld [vmem:[#allocation5 + $0x870] sm:$0xff]
    %v339 = vld [vmem:[#allocation5 + $0x878] sm:$0xff]
    %v340 = vld [vmem:[#allocation5 + $0x880] sm:$0xff]
    %v341 = vld [vmem:[#allocation5 + $0x888] sm:$0xff]
    %v342 = vld [vmem:[#allocation5 + $0x890] sm:$0xff]
    %v343 = vld [vmem:[#allocation5 + $0x898] sm:$0xff]
    %v344 = vld [vmem:[#allocation5 + $0x8a0] sm:$0xff]
    %v345 = vld [vmem:[#allocation5 + $0x8a8] sm:$0xff]
    %v346 = vld [vmem:[#allocation5 + $0x8b0] sm:$0xff]
    %v347 = vld [vmem:[#allocation5 + $0x8b8] sm:$0xff]
    %v348 = vld [vmem:[#allocation5 + $0x8c0] sm:$0xff]
    %v349 = vld [vmem:[#allocation5 + $0x8c8] sm:$0xff]
    %v350 = vld [vmem:[#allocation5 + $0x8d0] sm:$0xff]
    %v351 = vld [vmem:[#allocation5 + $0x8d8] sm:$0xff]
    %v352 = vld [vmem:[#allocation5 + $0x8e0] sm:$0xff]
    %v353 = vld [vmem:[#allocation5 + $0x8e8] sm:$0xff]
    %v354 = vld [vmem:[#allocation5 + $0x8f0] sm:$0xff]
    %v355 = vld [vmem:[#allocation5 + $0x8f8] sm:$0xff]
    %v356 = vld [vmem:[#allocation5 + $0x900] sm:$0xff]
    %v357 = vld [vmem:[#allocation5 + $0x908] sm:$0xff]
    %v358 = vld [vmem:[#allocation5 + $0x910] sm:$0xff]
    %v359 = vld [vmem:[#allocation5 + $0x918] sm:$0xff]
    %v360 = vld [vmem:[#allocation5 + $0x920] sm:$0xff]
    %v361 = vld [vmem:[#allocation5 + $0x928] sm:$0xff]
    %v362 = vld [vmem:[#allocation5 + $0x930] sm:$0xff]
    %v363 = vld [vmem:[#allocation5 + $0x938] sm:$0xff]
    %v364 = vld [vmem:[#allocation5 + $0x940] sm:$0xff]
    %v365 = vld [vmem:[#allocation5 + $0x948] sm:$0xff]
    %v366 = vld [vmem:[#allocation5 + $0x950] sm:$0xff]
    %v367 = vld [vmem:[#allocation5 + $0x958] sm:$0xff]
    %v368 = vld [vmem:[#allocation5 + $0x960] sm:$0xff]
    %v369 = vld [vmem:[#allocation5 + $0x968] sm:$0xff]
    %v370 = vld [vmem:[#allocation5 + $0x970] sm:$0xff]
    %v371 = vld [vmem:[#allocation5 + $0x978] sm:$0xff]
    %v372 = vld [vmem:[#allocation5 + $0x980] sm:$0xff]
    %v373 = vld [vmem:[#allocation5 + $0x988] sm:$0xff]
    %v374 = vld [vmem:[#allocation5 + $0x990] sm:$0xff]
    %v375 = vld [vmem:[#allocation5 + $0x998] sm:$0xff]
    %v376 = vld [vmem:[#allocation5 + $0x9a0] sm:$0xff]
    %v377 = vld [vmem:[#allocation5 + $0x9a8] sm:$0xff]
    %v378 = vld [vmem:[#allocation5 + $0x9b0] sm:$0xff]
    %v379 = vld [vmem:[#allocation5 + $0x9b8] sm:$0xff]
    %v380 = vld [vmem:[#allocation5 + $0x9c0] sm:$0xff]
    %v381 = vld [vmem:[#allocation5 + $0x9c8] sm:$0xff]
    %v382 = vld [vmem:[#allocation5 + $0x9d0] sm:$0xff]
    %v383 = vld [vmem:[#allocation5 + $0x9d8] sm:$0xff]
    %v384 = vld [vmem:[#allocation5 + $0x9e0] sm:$0xff]
    %v385 = vld [vmem:[#allocation5 + $0x9e8] sm:$0xff]
    %v386 = vld [vmem:[#allocation5 + $0x9f0] sm:$0xff]
    %v387 = vld [vmem:[#allocation5 + $0x9f8] sm:$0xff]
    %v388 = vld [vmem:[#allocation5 + $0xa00] sm:$0xff]
    %v389 = vld [vmem:[#allocation5 + $0xa08] sm:$0xff]
    %v390 = vld [vmem:[#allocation5 + $0xa10] sm:$0xff]
    %v391 = vld [vmem:[#allocation5 + $0xa18] sm:$0xff]
    %v392 = vld [vmem:[#allocation5 + $0xa20] sm:$0xff]
    %v393 = vld [vmem:[#allocation5 + $0xa28] sm:$0xff]
    %v394 = vld [vmem:[#allocation5 + $0xa30] sm:$0xff]
    %v395 = vld [vmem:[#allocation5 + $0xa38] sm:$0xff]
    %v396 = vld [vmem:[#allocation5 + $0xa40] sm:$0xff]
    %v397 = vld [vmem:[#allocation5 + $0xa48] sm:$0xff]
    %v398 = vld [vmem:[#allocation5 + $0xa50] sm:$0xff]
    %v399 = vld [vmem:[#allocation5 + $0xa58] sm:$0xff]
    %v400 = vld [vmem:[#allocation5 + $0xa60] sm:$0xff]
    %v401 = vld [vmem:[#allocation5 + $0xa68] sm:$0xff]
    %v402 = vld [vmem:[#allocation5 + $0xa70] sm:$0xff]
    %v403 = vld [vmem:[#allocation5 + $0xa78] sm:$0xff]
    %v404 = vld [vmem:[#allocation5 + $0xa80] sm:$0xff]
    %v405 = vld [vmem:[#allocation5 + $0xa88] sm:$0xff]
    %v406 = vld [vmem:[#allocation5 + $0xa90] sm:$0xff]
    %v407 = vld [vmem:[#allocation5 + $0xa98] sm:$0xff]
    %v408 = vld [vmem:[#allocation5 + $0xaa0] sm:$0xff]
    %v409 = vld [vmem:[#allocation5 + $0xaa8] sm:$0xff]
    %v410 = vld [vmem:[#allocation5 + $0xab0] sm:$0xff]
    %v411 = vld [vmem:[#allocation5 + $0xab8] sm:$0xff]
    %v412 = vld [vmem:[#allocation5 + $0xac0] sm:$0xff]
    %v413 = vld [vmem:[#allocation5 + $0xac8] sm:$0xff]
    %v414 = vld [vmem:[#allocation5 + $0xad0] sm:$0xff]
    %v415 = vld [vmem:[#allocation5 + $0xad8] sm:$0xff]
    %v416 = vld [vmem:[#allocation5 + $0xae0] sm:$0xff]
    %v417 = vld [vmem:[#allocation5 + $0xae8] sm:$0xff]
    %v418 = vld [vmem:[#allocation5 + $0xaf0] sm:$0xff]
    %v419 = vld [vmem:[#allocation5 + $0xaf8] sm:$0xff]
    %v420 = vld [vmem:[#allocation5 + $0xb00] sm:$0xff]
    %v421 = vld [vmem:[#allocation5 + $0xb08] sm:$0xff]
    %v422 = vld [vmem:[#allocation5 + $0xb10] sm:$0xff]
    %v423 = vld [vmem:[#allocation5 + $0xb18] sm:$0xff]
    %v424 = vld [vmem:[#allocation5 + $0xb20] sm:$0xff]
    %v425 = vld [vmem:[#allocation5 + $0xb28] sm:$0xff]
    %v426 = vld [vmem:[#allocation5 + $0xb30] sm:$0xff]
    %v427 = vld [vmem:[#allocation5 + $0xb38] sm:$0xff]
    %v428 = vld [vmem:[#allocation5 + $0xb40] sm:$0xff]
    %v429 = vld [vmem:[#allocation5 + $0xb48] sm:$0xff]
    %v430 = vld [vmem:[#allocation5 + $0xb50] sm:$0xff]
    %v431 = vld [vmem:[#allocation5 + $0xb58] sm:$0xff]
    %v432 = vld [vmem:[#allocation5 + $0xb60] sm:$0xff]
    %v433 = vld [vmem:[#allocation5 + $0xb68] sm:$0xff]
    %v434 = vld [vmem:[#allocation5 + $0xb70] sm:$0xff]
    %v435 = vld [vmem:[#allocation5 + $0xb78] sm:$0xff]
    %v436 = vld [vmem:[#allocation5 + $0xb80] sm:$0xff]
    %v437 = vld [vmem:[#allocation5 + $0xb88] sm:$0xff]
    %v438 = vld [vmem:[#allocation5 + $0xb90] sm:$0xff]
    %v439 = vld [vmem:[#allocation5 + $0xb98] sm:$0xff]
    %v440 = vld [vmem:[#allocation5 + $0xba0] sm:$0xff]
    %v441 = vld [vmem:[#allocation5 + $0xba8] sm:$0xff]
    %v442 = vld [vmem:[#allocation5 + $0xbb0] sm:$0xff]
    %v443 = vld [vmem:[#allocation5 + $0xbb8] sm:$0xff]
    %v444 = vld [vmem:[#allocation5 + $0xbc0] sm:$0xff]
    %v445 = vld [vmem:[#allocation5 + $0xbc8] sm:$0xff]
    %v446 = vld [vmem:[#allocation5 + $0xbd0] sm:$0xff]
    %v447 = vld [vmem:[#allocation5 + $0xbd8] sm:$0xff]
    %v448 = vld [vmem:[#allocation5 + $0xbe0] sm:$0xff]
    %v449 = vld [vmem:[#allocation5 + $0xbe8] sm:$0xff]
    %v450 = vld [vmem:[#allocation5 + $0xbf0] sm:$0xff]
    %v451 = vld [vmem:[#allocation5 + $0xbf8] sm:$0xff]
    %v452 = vld [vmem:[#allocation5 + $0xc00] sm:$0xff]
    %v453 = vld [vmem:[#allocation5 + $0xc08] sm:$0xff]
    %v454 = vld [vmem:[#allocation5 + $0xc10] sm:$0xff]
    %v455 = vld [vmem:[#allocation5 + $0xc18] sm:$0xff]
    %v456 = vld [vmem:[#allocation5 + $0xc20] sm:$0xff]
    %v457 = vld [vmem:[#allocation5 + $0xc28] sm:$0xff]
    %v458 = vld [vmem:[#allocation5 + $0xc30] sm:$0xff]
    %v459 = vld [vmem:[#allocation5 + $0xc38] sm:$0xff]
    %v460 = vld [vmem:[#allocation5 + $0xc40] sm:$0xff]
    %v461 = vld [vmem:[#allocation5 + $0xc48] sm:$0xff]
    %v462 = vld [vmem:[#allocation5 + $0xc50] sm:$0xff]
    %v463 = vld [vmem:[#allocation5 + $0xc58] sm:$0xff]
    %v464 = vld [vmem:[#allocation5 + $0xc60] sm:$0xff]
    %v465 = vld [vmem:[#allocation5 + $0xc68] sm:$0xff]
    %v466 = vld [vmem:[#allocation5 + $0xc70] sm:$0xff]
    %v467 = vld [vmem:[#allocation5 + $0xc78] sm:$0xff]
    %v468 = vld [vmem:[#allocation5 + $0xc80] sm:$0xff]
    %v469 = vld [vmem:[#allocation5 + $0xc88] sm:$0xff]
    %v470 = vld [vmem:[#allocation5 + $0xc90] sm:$0xff]
    %v471 = vld [vmem:[#allocation5 + $0xc98] sm:$0xff]
    %v472 = vld [vmem:[#allocation5 + $0xca0] sm:$0xff]
    %v473 = vld [vmem:[#allocation5 + $0xca8] sm:$0xff]
    %v474 = vld [vmem:[#allocation5 + $0xcb0] sm:$0xff]
    %v475 = vld [vmem:[#allocation5 + $0xcb8] sm:$0xff]
    %v476 = vld [vmem:[#allocation5 + $0xcc0] sm:$0xff]
    %v477 = vld [vmem:[#allocation5 + $0xcc8] sm:$0xff]
    %v478 = vld [vmem:[#allocation5 + $0xcd0] sm:$0xff]
    %v479 = vld [vmem:[#allocation5 + $0xcd8] sm:$0xff]
    %v480 = vld [vmem:[#allocation5 + $0xce0] sm:$0xff]
    %v481 = vld [vmem:[#allocation5 + $0xce8] sm:$0xff]
    %v482 = vld [vmem:[#allocation5 + $0xcf0] sm:$0xff]
    %v483 = vld [vmem:[#allocation5 + $0xcf8] sm:$0xff]
    %v484 = vld [vmem:[#allocation5 + $0xd00] sm:$0xff]
    %v485 = vld [vmem:[#allocation5 + $0xd08] sm:$0xff]
    %v486 = vld [vmem:[#allocation5 + $0xd10] sm:$0xff]
    %v487 = vld [vmem:[#allocation5 + $0xd18] sm:$0xff]
    %v488 = vld [vmem:[#allocation5 + $0xd20] sm:$0xff]
    %v489 = vld [vmem:[#allocation5 + $0xd28] sm:$0xff]
    %v490 = vld [vmem:[#allocation5 + $0xd30] sm:$0xff]
    %v491 = vld [vmem:[#allocation5 + $0xd38] sm:$0xff]
    %v492 = vld [vmem:[#allocation5 + $0xd40] sm:$0xff]
    %v493 = vld [vmem:[#allocation5 + $0xd48] sm:$0xff]
    %v494 = vld [vmem:[#allocation5 + $0xd50] sm:$0xff]
    %v495 = vld [vmem:[#allocation5 + $0xd58] sm:$0xff]
    %v496 = vld [vmem:[#allocation5 + $0xd60] sm:$0xff]
    %v497 = vld [vmem:[#allocation5 + $0xd68] sm:$0xff]
    %v498 = vld [vmem:[#allocation5 + $0xd70] sm:$0xff]
    %v499 = vld [vmem:[#allocation5 + $0xd78] sm:$0xff]
    %v500 = vld [vmem:[#allocation5 + $0xd80] sm:$0xff]
    %v501 = vld [vmem:[#allocation5 + $0xd88] sm:$0xff]
    %v502 = vld [vmem:[#allocation5 + $0xd90] sm:$0xff]
    %v503 = vld [vmem:[#allocation5 + $0xd98] sm:$0xff]
    %v504 = vld [vmem:[#allocation5 + $0xda0] sm:$0xff]
    %v505 = vld [vmem:[#allocation5 + $0xda8] sm:$0xff]
    %v506 = vld [vmem:[#allocation5 + $0xdb0] sm:$0xff]
    %v507 = vld [vmem:[#allocation5 + $0xdb8] sm:$0xff]
    %v508 = vld [vmem:[#allocation5 + $0xdc0] sm:$0xff]
    %v509 = vld [vmem:[#allocation5 + $0xdc8] sm:$0xff]
    %v510 = vld [vmem:[#allocation5 + $0xdd0] sm:$0xff]
    %v511 = vld [vmem:[#allocation5 + $0xdd8] sm:$0xff]
    %v512 = vld [vmem:[#allocation5 + $0xde0] sm:$0xff]
    %v513 = vld [vmem:[#allocation5 + $0xde8] sm:$0xff]
    %v514 = vld [vmem:[#allocation5 + $0xdf0] sm:$0xff]
    %v515 = vld [vmem:[#allocation5 + $0xdf8] sm:$0xff]
    %v516 = vld [vmem:[#allocation5 + $0xe00] sm:$0xff]
    %v517 = vld [vmem:[#allocation5 + $0xe08] sm:$0xff]
    %v518 = vld [vmem:[#allocation5 + $0xe10] sm:$0xff]
    %v519 = vld [vmem:[#allocation5 + $0xe18] sm:$0xff]
    %v520 = vld [vmem:[#allocation5 + $0xe20] sm:$0xff]
    %v521 = vld [vmem:[#allocation5 + $0xe28] sm:$0xff]
    %v522 = vld [vmem:[#allocation5 + $0xe30] sm:$0xff]
    %v523 = vld [vmem:[#allocation5 + $0xe38] sm:$0xff]
    %v524 = vld [vmem:[#allocation5 + $0xe40] sm:$0xff]
    %v525 = vld [vmem:[#allocation5 + $0xe48] sm:$0xff]
    %v526 = vld [vmem:[#allocation5 + $0xe50] sm:$0xff]
    %v527 = vld [vmem:[#allocation5 + $0xe58] sm:$0xff]
    %v528 = vld [vmem:[#allocation5 + $0xe60] sm:$0xff]
    %v529 = vld [vmem:[#allocation5 + $0xe68] sm:$0xff]
    %v530 = vld [vmem:[#allocation5 + $0xe70] sm:$0xff]
    %v531 = vld [vmem:[#allocation5 + $0xe78] sm:$0xff]
    %v532 = vld [vmem:[#allocation5 + $0xe80] sm:$0xff]
    %v533 = vld [vmem:[#allocation5 + $0xe88] sm:$0xff]
    %v534 = vld [vmem:[#allocation5 + $0xe90] sm:$0xff]
    %v535 = vld [vmem:[#allocation5 + $0xe98] sm:$0xff]
    %v536 = vld [vmem:[#allocation5 + $0xea0] sm:$0xff]
    %v537 = vld [vmem:[#allocation5 + $0xea8] sm:$0xff]
    %v538 = vld [vmem:[#allocation5 + $0xeb0] sm:$0xff]
    %v539 = vld [vmem:[#allocation5 + $0xeb8] sm:$0xff]
    %v540 = vld [vmem:[#allocation5 + $0xec0] sm:$0xff]
    %v541 = vld [vmem:[#allocation5 + $0xec8] sm:$0xff]
    %v542 = vld [vmem:[#allocation5 + $0xed0] sm:$0xff]
    %v543 = vld [vmem:[#allocation5 + $0xed8] sm:$0xff]
    %v544 = vld [vmem:[#allocation5 + $0xee0] sm:$0xff]
    %v545 = vld [vmem:[#allocation5 + $0xee8] sm:$0xff]
    %v546 = vld [vmem:[#allocation5 + $0xef0] sm:$0xff]
    %v547 = vld [vmem:[#allocation5 + $0xef8] sm:$0xff]
    %v548 = vld [vmem:[#allocation5 + $0xf00] sm:$0xff]
    %v549 = vld [vmem:[#allocation5 + $0xf08] sm:$0xff]
    %v550 = vld [vmem:[#allocation5 + $0xf10] sm:$0xff]
    %v551 = vld [vmem:[#allocation5 + $0xf18] sm:$0xff]
    %v552 = vld [vmem:[#allocation5 + $0xf20] sm:$0xff]
    %v553 = vld [vmem:[#allocation5 + $0xf28] sm:$0xff]
    %v554 = vld [vmem:[#allocation5 + $0xf30] sm:$0xff]
    %v555 = vld [vmem:[#allocation5 + $0xf38] sm:$0xff]
    %v556 = vld [vmem:[#allocation5 + $0xf40] sm:$0xff]
    %v557 = vld [vmem:[#allocation5 + $0xf48] sm:$0xff]
    %v558 = vld [vmem:[#allocation5 + $0xf50] sm:$0xff]
    %v559 = vld [vmem:[#allocation5 + $0xf58] sm:$0xff]
    %v560 = vld [vmem:[#allocation5 + $0xf60] sm:$0xff]
    %v561 = vld [vmem:[#allocation5 + $0xf68] sm:$0xff]
    %v562 = vld [vmem:[#allocation5 + $0xf70] sm:$0xff]
    %v563 = vld [vmem:[#allocation5 + $0xf78] sm:$0xff]
    %v564 = vld [vmem:[#allocation5 + $0xf80] sm:$0xff]
    %v565 = vld [vmem:[#allocation5 + $0xf88] sm:$0xff]
    %v566 = vld [vmem:[#allocation5 + $0xf90] sm:$0xff]
    %v567 = vld [vmem:[#allocation5 + $0xf98] sm:$0xff]
    %v568 = vld [vmem:[#allocation5 + $0xfa0] sm:$0xff]
    %v569 = vld [vmem:[#allocation5 + $0xfa8] sm:$0xff]
    %v570 = vld [vmem:[#allocation5 + $0xfb0] sm:$0xff]
    %v571 = vld [vmem:[#allocation5 + $0xfb8] sm:$0xff]
    %v572 = vld [vmem:[#allocation5 + $0xfc0] sm:$0xff]
    %v573 = vld [vmem:[#allocation5 + $0xfc8] sm:$0xff]
    %v574 = vld [vmem:[#allocation5 + $0xfd0] sm:$0xff]
    %v575 = vld [vmem:[#allocation5 + $0xfd8] sm:$0xff]
    %v576 = vld [vmem:[#allocation5 + $0xfe0] sm:$0xff]
    %v577 = vld [vmem:[#allocation5 + $0xfe8] sm:$0xff]
    %v578 = vld [vmem:[#allocation5 + $0xff0] sm:$0xff]
    %v579 = vld [vmem:[#allocation5 + $0xff8] sm:$0xff]
    %v580 = vld [vmem:[#allocation7] sm:$0x3]
    %v582 = vlaneseq
    %v583 = vshrl.u32 %v582, 7
    %v584 = vsub.s32 0, %v583
    %v585 = vrot.slane %v580, %v584
    %v586 = vlaneseq
    %v587 = vshrl.u32 %v586, 7
    %v588 = vsub.s32 1, %v587
    %v589 = vrot.slane %v580, %v588
    %592 = vmatprep.subr.mxu0 %v99
    %593 = vmatpush1.msra.mxu0 %v98
    %594 = vmatprep.subr.mxu0 %v97
    %595 = vmatpush1.msra.mxu0 %v96
    %596 = vmatprep.subr.mxu0 %v95
    %597 = vmatpush1.msra.mxu0 %v94
    %598 = vmatprep.subr.mxu0 %v93
    %599 = vmatpush1.msra.mxu0 %v92
    %600 = vmatprep.subr.mxu0 %v91
    %601 = vmatpush1.msra.mxu0 %v90
    %602 = vmatprep.subr.mxu0 %v89
    %603 = vmatpush1.msra.mxu0 %v88
    %604 = vmatprep.subr.mxu0 %v87
    %605 = vmatpush1.msra.mxu0 %v86
    %606 = vmatprep.subr.mxu0 %v85
    %607 = vmatpush1.msra.mxu0 %v84
    %608 = vmatprep.subr.mxu0 %v83
    %609 = vmatpush1.msra.mxu0 %v82
    %610 = vmatprep.subr.mxu0 %v81
    %611 = vmatpush1.msra.mxu0 %v80
    %612 = vmatprep.subr.mxu0 %v79
    %613 = vmatpush1.msra.mxu0 %v78
    %614 = vmatprep.subr.mxu0 %v77
    %615 = vmatpush1.msra.mxu0 %v76
    %616 = vmatprep.subr.mxu0 %v75
    %617 = vmatpush1.msra.mxu0 %v74
    %618 = vmatprep.subr.mxu0 %v73
    %619 = vmatpush1.msra.mxu0 %v72
    %620 = vmatprep.subr.mxu0 %v71
    %621 = vmatpush1.msra.mxu0 %v70
    %622 = vmatprep.subr.mxu0 %v69
    %623 = vmatpush1.msra.mxu0 %v68
    %624 = vmatprep.subr.mxu0 %v131
    %625 = vmatpush2.msra.mxu0 %v130
    %626 = vmatprep.subr.mxu0 %v129
    %627 = vmatpush2.msra.mxu0 %v128
    %628 = vmatprep.subr.mxu0 %v127
    %629 = vmatpush2.msra.mxu0 %v126
    %630 = vmatprep.subr.mxu0 %v125
    %631 = vmatpush2.msra.mxu0 %v124
    %632 = vmatprep.subr.mxu0 %v123
    %633 = vmatpush2.msra.mxu0 %v122
    %634 = vmatprep.subr.mxu0 %v121
    %635 = vmatpush2.msra.mxu0 %v120
    %636 = vmatprep.subr.mxu0 %v119
    %637 = vmatpush2.msra.mxu0 %v118
    %638 = vmatprep.subr.mxu0 %v117
    %639 = vmatpush2.msra.mxu0 %v116
    %640 = vmatprep.subr.mxu0 %v115
    %641 = vmatpush2.msra.mxu0 %v114
    %642 = vmatprep.subr.mxu0 %v113
    %643 = vmatpush2.msra.mxu0 %v112
    %644 = vmatprep.subr.mxu0 %v111
    %645 = vmatpush2.msra.mxu0 %v110
    %646 = vmatprep.subr.mxu0 %v109
    %647 = vmatpush2.msra.mxu0 %v108
    %648 = vmatprep.subr.mxu0 %v107
    %649 = vmatpush2.msra.mxu0 %v106
    %650 = vmatprep.subr.mxu0 %v105
    %651 = vmatpush2.msra.mxu0 %v104
    %652 = vmatprep.subr.mxu0 %v103
    %653 = vmatpush2.msra.mxu0 %v102
    %654 = vmatprep.subr.mxu0 %v101
    %655 = vmatpush2.msra.mxu0 %v100
    %656 = vmatprep.mubr.f32.mxu0 %v53
    %657 = vmatmul.mubr.f32.gmra.mxu0 %v52
    %v658 = vpop.f32.mrf.mxu0
    %v659 = vadd.f32 %v585, %v658
    %v660 = vpop.f32.mrf.mxu0
    %v661 = vadd.f32 %v589, %v660
    %662 = vdwg.mxu0
    %663 = vmatprep.subr.mxu0 %v163
    %664 = vmatpush1.msra.mxu0 %v162
    %665 = vmatprep.subr.mxu0 %v161
    %666 = vmatpush1.msra.mxu0 %v160
    %667 = vmatprep.subr.mxu0 %v159
    %668 = vmatpush1.msra.mxu0 %v158
    %669 = vmatprep.subr.mxu0 %v157
    %670 = vmatpush1.msra.mxu0 %v156
    %671 = vmatprep.subr.mxu0 %v155
    %672 = vmatpush1.msra.mxu0 %v154
    %673 = vmatprep.subr.mxu0 %v153
    %674 = vmatpush1.msra.mxu0 %v152
    %675 = vmatprep.subr.mxu0 %v151
    %676 = vmatpush1.msra.mxu0 %v150
    %677 = vmatprep.subr.mxu0 %v149
    %678 = vmatpush1.msra.mxu0 %v148
    %679 = vmatprep.subr.mxu0 %v147
    %680 = vmatpush1.msra.mxu0 %v146
    %681 = vmatprep.subr.mxu0 %v145
    %682 = vmatpush1.msra.mxu0 %v144
    %683 = vmatprep.subr.mxu0 %v143
    %684 = vmatpush1.msra.mxu0 %v142
    %685 = vmatprep.subr.mxu0 %v141
    %686 = vmatpush1.msra.mxu0 %v140
    %687 = vmatprep.subr.mxu0 %v139
    %688 = vmatpush1.msra.mxu0 %v138
    %689 = vmatprep.subr.mxu0 %v137
    %690 = vmatpush1.msra.mxu0 %v136
    %691 = vmatprep.subr.mxu0 %v135
    %692 = vmatpush1.msra.mxu0 %v134
    %693 = vmatprep.subr.mxu0 %v133
    %694 = vmatpush1.msra.mxu0 %v132
    %695 = vmatprep.subr.mxu0 %v195
    %696 = vmatpush2.msra.mxu0 %v194
    %697 = vmatprep.subr.mxu0 %v193
    %698 = vmatpush2.msra.mxu0 %v192
    %699 = vmatprep.subr.mxu0 %v191
    %700 = vmatpush2.msra.mxu0 %v190
    %701 = vmatprep.subr.mxu0 %v189
    %702 = vmatpush2.msra.mxu0 %v188
    %703 = vmatprep.subr.mxu0 %v187
    %704 = vmatpush2.msra.mxu0 %v186
    %705 = vmatprep.subr.mxu0 %v185
    %706 = vmatpush2.msra.mxu0 %v184
    %707 = vmatprep.subr.mxu0 %v183
    %708 = vmatpush2.msra.mxu0 %v182
    %709 = vmatprep.subr.mxu0 %v181
    %710 = vmatpush2.msra.mxu0 %v180
    %711 = vmatprep.subr.mxu0 %v179
    %712 = vmatpush2.msra.mxu0 %v178
    %713 = vmatprep.subr.mxu0 %v177
    %714 = vmatpush2.msra.mxu0 %v176
    %715 = vmatprep.subr.mxu0 %v175
    %716 = vmatpush2.msra.mxu0 %v174
    %717 = vmatprep.subr.mxu0 %v173
    %718 = vmatpush2.msra.mxu0 %v172
    %719 = vmatprep.subr.mxu0 %v171
    %720 = vmatpush2.msra.mxu0 %v170
    %721 = vmatprep.subr.mxu0 %v169
    %722 = vmatpush2.msra.mxu0 %v168
    %723 = vmatprep.subr.mxu0 %v167
    %724 = vmatpush2.msra.mxu0 %v166
    %725 = vmatprep.subr.mxu0 %v165
    %726 = vmatpush2.msra.mxu0 %v164
    %727 = vmatprep.mubr.f32.mxu0 %v55
    %728 = vmatmul.mubr.f32.gmra.mxu0 %v54
    %v729 = vpop.f32.mrf.mxu0
    %v730 = vadd.f32 %v659, %v729
    %v731 = vpop.f32.mrf.mxu0
    %v732 = vadd.f32 %v661, %v731
    %733 = vdwg.mxu0
    %734 = vmatprep.subr.mxu0 %v227
    %735 = vmatpush1.msra.mxu0 %v226
    %736 = vmatprep.subr.mxu0 %v225
    %737 = vmatpush1.msra.mxu0 %v224
    %738 = vmatprep.subr.mxu0 %v223
    %739 = vmatpush1.msra.mxu0 %v222
    %740 = vmatprep.subr.mxu0 %v221
    %741 = vmatpush1.msra.mxu0 %v220
    %742 = vmatprep.subr.mxu0 %v219
    %743 = vmatpush1.msra.mxu0 %v218
    %744 = vmatprep.subr.mxu0 %v217
    %745 = vmatpush1.msra.mxu0 %v216
    %746 = vmatprep.subr.mxu0 %v215
    %747 = vmatpush1.msra.mxu0 %v214
    %748 = vmatprep.subr.mxu0 %v213
    %749 = vmatpush1.msra.mxu0 %v212
    %750 = vmatprep.subr.mxu0 %v211
    %751 = vmatpush1.msra.mxu0 %v210
    %752 = vmatprep.subr.mxu0 %v209
    %753 = vmatpush1.msra.mxu0 %v208
    %754 = vmatprep.subr.mxu0 %v207
    %755 = vmatpush1.msra.mxu0 %v206
    %756 = vmatprep.subr.mxu0 %v205
    %757 = vmatpush1.msra.mxu0 %v204
    %758 = vmatprep.subr.mxu0 %v203
    %759 = vmatpush1.msra.mxu0 %v202
    %760 = vmatprep.subr.mxu0 %v201
    %761 = vmatpush1.msra.mxu0 %v200
    %762 = vmatprep.subr.mxu0 %v199
    %763 = vmatpush1.msra.mxu0 %v198
    %764 = vmatprep.subr.mxu0 %v197
    %765 = vmatpush1.msra.mxu0 %v196
    %766 = vmatprep.subr.mxu0 %v259
    %767 = vmatpush2.msra.mxu0 %v258
    %768 = vmatprep.subr.mxu0 %v257
    %769 = vmatpush2.msra.mxu0 %v256
    %770 = vmatprep.subr.mxu0 %v255
    %771 = vmatpush2.msra.mxu0 %v254
    %772 = vmatprep.subr.mxu0 %v253
    %773 = vmatpush2.msra.mxu0 %v252
    %774 = vmatprep.subr.mxu0 %v251
    %775 = vmatpush2.msra.mxu0 %v250
    %776 = vmatprep.subr.mxu0 %v249
    %777 = vmatpush2.msra.mxu0 %v248
    %778 = vmatprep.subr.mxu0 %v247
    %779 = vmatpush2.msra.mxu0 %v246
    %780 = vmatprep.subr.mxu0 %v245
    %781 = vmatpush2.msra.mxu0 %v244
    %782 = vmatprep.subr.mxu0 %v243
    %783 = vmatpush2.msra.mxu0 %v242
    %784 = vmatprep.subr.mxu0 %v241
    %785 = vmatpush2.msra.mxu0 %v240
    %786 = vmatprep.subr.mxu0 %v239
    %787 = vmatpush2.msra.mxu0 %v238
    %788 = vmatprep.subr.mxu0 %v237
    %789 = vmatpush2.msra.mxu0 %v236
    %790 = vmatprep.subr.mxu0 %v235
    %791 = vmatpush2.msra.mxu0 %v234
    %792 = vmatprep.subr.mxu0 %v233
    %793 = vmatpush2.msra.mxu0 %v232
    %794 = vmatprep.subr.mxu0 %v231
    %795 = vmatpush2.msra.mxu0 %v230
    %796 = vmatprep.subr.mxu0 %v229
    %797 = vmatpush2.msra.mxu0 %v228
    %798 = vmatprep.mubr.f32.mxu0 %v57
    %799 = vmatmul.mubr.f32.gmra.mxu0 %v56
    %v800 = vpop.f32.mrf.mxu0
    %v801 = vadd.f32 %v730, %v800
    %v802 = vpop.f32.mrf.mxu0
    %v803 = vadd.f32 %v732, %v802
    %804 = vdwg.mxu0
    %805 = vmatprep.subr.mxu0 %v291
    %806 = vmatpush1.msra.mxu0 %v290
    %807 = vmatprep.subr.mxu0 %v289
    %808 = vmatpush1.msra.mxu0 %v288
    %809 = vmatprep.subr.mxu0 %v287
    %810 = vmatpush1.msra.mxu0 %v286
    %811 = vmatprep.subr.mxu0 %v285
    %812 = vmatpush1.msra.mxu0 %v284
    %813 = vmatprep.subr.mxu0 %v283
    %814 = vmatpush1.msra.mxu0 %v282
    %815 = vmatprep.subr.mxu0 %v281
    %816 = vmatpush1.msra.mxu0 %v280
    %817 = vmatprep.subr.mxu0 %v279
    %818 = vmatpush1.msra.mxu0 %v278
    %819 = vmatprep.subr.mxu0 %v277
    %820 = vmatpush1.msra.mxu0 %v276
    %821 = vmatprep.subr.mxu0 %v275
    %822 = vmatpush1.msra.mxu0 %v274
    %823 = vmatprep.subr.mxu0 %v273
    %824 = vmatpush1.msra.mxu0 %v272
    %825 = vmatprep.subr.mxu0 %v271
    %826 = vmatpush1.msra.mxu0 %v270
    %827 = vmatprep.subr.mxu0 %v269
    %828 = vmatpush1.msra.mxu0 %v268
    %829 = vmatprep.subr.mxu0 %v267
    %830 = vmatpush1.msra.mxu0 %v266
    %831 = vmatprep.subr.mxu0 %v265
    %832 = vmatpush1.msra.mxu0 %v264
    %833 = vmatprep.subr.mxu0 %v263
    %834 = vmatpush1.msra.mxu0 %v262
    %835 = vmatprep.subr.mxu0 %v261
    %836 = vmatpush1.msra.mxu0 %v260
    %837 = vmatprep.subr.mxu0 %v323
    %838 = vmatpush2.msra.mxu0 %v322
    %839 = vmatprep.subr.mxu0 %v321
    %840 = vmatpush2.msra.mxu0 %v320
    %841 = vmatprep.subr.mxu0 %v319
    %842 = vmatpush2.msra.mxu0 %v318
    %843 = vmatprep.subr.mxu0 %v317
    %844 = vmatpush2.msra.mxu0 %v316
    %845 = vmatprep.subr.mxu0 %v315
    %846 = vmatpush2.msra.mxu0 %v314
    %847 = vmatprep.subr.mxu0 %v313
    %848 = vmatpush2.msra.mxu0 %v312
    %849 = vmatprep.subr.mxu0 %v311
    %850 = vmatpush2.msra.mxu0 %v310
    %851 = vmatprep.subr.mxu0 %v309
    %852 = vmatpush2.msra.mxu0 %v308
    %853 = vmatprep.subr.mxu0 %v307
    %854 = vmatpush2.msra.mxu0 %v306
    %855 = vmatprep.subr.mxu0 %v305
    %856 = vmatpush2.msra.mxu0 %v304
    %857 = vmatprep.subr.mxu0 %v303
    %858 = vmatpush2.msra.mxu0 %v302
    %859 = vmatprep.subr.mxu0 %v301
    %860 = vmatpush2.msra.mxu0 %v300
    %861 = vmatprep.subr.mxu0 %v299
    %862 = vmatpush2.msra.mxu0 %v298
    %863 = vmatprep.subr.mxu0 %v297
    %864 = vmatpush2.msra.mxu0 %v296
    %865 = vmatprep.subr.mxu0 %v295
    %866 = vmatpush2.msra.mxu0 %v294
    %867 = vmatprep.subr.mxu0 %v293
    %868 = vmatpush2.msra.mxu0 %v292
    %869 = vmatprep.mubr.f32.mxu0 %v59
    %870 = vmatmul.mubr.f32.gmra.mxu0 %v58
    %v871 = vpop.f32.mrf.mxu0
    %v872 = vadd.f32 %v801, %v871
    %v873 = vpop.f32.mrf.mxu0
    %v874 = vadd.f32 %v803, %v873
    %875 = vdwg.mxu0
    %876 = vmatprep.subr.mxu0 %v355
    %877 = vmatpush1.msra.mxu0 %v354
    %878 = vmatprep.subr.mxu0 %v353
    %879 = vmatpush1.msra.mxu0 %v352
    %880 = vmatprep.subr.mxu0 %v351
    %881 = vmatpush1.msra.mxu0 %v350
    %882 = vmatprep.subr.mxu0 %v349
    %883 = vmatpush1.msra.mxu0 %v348
    %884 = vmatprep.subr.mxu0 %v347
    %885 = vmatpush1.msra.mxu0 %v346
    %886 = vmatprep.subr.mxu0 %v345
    %887 = vmatpush1.msra.mxu0 %v344
    %888 = vmatprep.subr.mxu0 %v343
    %889 = vmatpush1.msra.mxu0 %v342
    %890 = vmatprep.subr.mxu0 %v341
    %891 = vmatpush1.msra.mxu0 %v340
    %892 = vmatprep.subr.mxu0 %v339
    %893 = vmatpush1.msra.mxu0 %v338
    %894 = vmatprep.subr.mxu0 %v337
    %895 = vmatpush1.msra.mxu0 %v336
    %896 = vmatprep.subr.mxu0 %v335
    %897 = vmatpush1.msra.mxu0 %v334
    %898 = vmatprep.subr.mxu0 %v333
    %899 = vmatpush1.msra.mxu0 %v332
    %900 = vmatprep.subr.mxu0 %v331
    %901 = vmatpush1.msra.mxu0 %v330
    %902 = vmatprep.subr.mxu0 %v329
    %903 = vmatpush1.msra.mxu0 %v328
    %904 = vmatprep.subr.mxu0 %v327
    %905 = vmatpush1.msra.mxu0 %v326
    %906 = vmatprep.subr.mxu0 %v325
    %907 = vmatpush1.msra.mxu0 %v324
    %908 = vmatprep.subr.mxu0 %v387
    %909 = vmatpush2.msra.mxu0 %v386
    %910 = vmatprep.subr.mxu0 %v385
    %911 = vmatpush2.msra.mxu0 %v384
    %912 = vmatprep.subr.mxu0 %v383
    %913 = vmatpush2.msra.mxu0 %v382
    %914 = vmatprep.subr.mxu0 %v381
    %915 = vmatpush2.msra.mxu0 %v380
    %916 = vmatprep.subr.mxu0 %v379
    %917 = vmatpush2.msra.mxu0 %v378
    %918 = vmatprep.subr.mxu0 %v377
    %919 = vmatpush2.msra.mxu0 %v376
    %920 = vmatprep.subr.mxu0 %v375
    %921 = vmatpush2.msra.mxu0 %v374
    %922 = vmatprep.subr.mxu0 %v373
    %923 = vmatpush2.msra.mxu0 %v372
    %924 = vmatprep.subr.mxu0 %v371
    %925 = vmatpush2.msra.mxu0 %v370
    %926 = vmatprep.subr.mxu0 %v369
    %927 = vmatpush2.msra.mxu0 %v368
    %928 = vmatprep.subr.mxu0 %v367
    %929 = vmatpush2.msra.mxu0 %v366
    %930 = vmatprep.subr.mxu0 %v365
    %931 = vmatpush2.msra.mxu0 %v364
    %932 = vmatprep.subr.mxu0 %v363
    %933 = vmatpush2.msra.mxu0 %v362
    %934 = vmatprep.subr.mxu0 %v361
    %935 = vmatpush2.msra.mxu0 %v360
    %936 = vmatprep.subr.mxu0 %v359
    %937 = vmatpush2.msra.mxu0 %v358
    %938 = vmatprep.subr.mxu0 %v357
    %939 = vmatpush2.msra.mxu0 %v356
    %940 = vmatprep.mubr.f32.mxu0 %v61
    %941 = vmatmul.mubr.f32.gmra.mxu0 %v60
    %v942 = vpop.f32.mrf.mxu0
    %v943 = vadd.f32 %v872, %v942
    %v944 = vpop.f32.mrf.mxu0
    %v945 = vadd.f32 %v874, %v944
    %946 = vdwg.mxu0
    %947 = vmatprep.subr.mxu0 %v419
    %948 = vmatpush1.msra.mxu0 %v418
    %949 = vmatprep.subr.mxu0 %v417
    %950 = vmatpush1.msra.mxu0 %v416
    %951 = vmatprep.subr.mxu0 %v415
    %952 = vmatpush1.msra.mxu0 %v414
    %953 = vmatprep.subr.mxu0 %v413
    %954 = vmatpush1.msra.mxu0 %v412
    %955 = vmatprep.subr.mxu0 %v411
    %956 = vmatpush1.msra.mxu0 %v410
    %957 = vmatprep.subr.mxu0 %v409
    %958 = vmatpush1.msra.mxu0 %v408
    %959 = vmatprep.subr.mxu0 %v407
    %960 = vmatpush1.msra.mxu0 %v406
    %961 = vmatprep.subr.mxu0 %v405
    %962 = vmatpush1.msra.mxu0 %v404
    %963 = vmatprep.subr.mxu0 %v403
    %964 = vmatpush1.msra.mxu0 %v402
    %965 = vmatprep.subr.mxu0 %v401
    %966 = vmatpush1.msra.mxu0 %v400
    %967 = vmatprep.subr.mxu0 %v399
    %968 = vmatpush1.msra.mxu0 %v398
    %969 = vmatprep.subr.mxu0 %v397
    %970 = vmatpush1.msra.mxu0 %v396
    %971 = vmatprep.subr.mxu0 %v395
    %972 = vmatpush1.msra.mxu0 %v394
    %973 = vmatprep.subr.mxu0 %v393
    %974 = vmatpush1.msra.mxu0 %v392
    %975 = vmatprep.subr.mxu0 %v391
    %976 = vmatpush1.msra.mxu0 %v390
    %977 = vmatprep.subr.mxu0 %v389
    %978 = vmatpush1.msra.mxu0 %v388
    %979 = vmatprep.subr.mxu0 %v451
    %980 = vmatpush2.msra.mxu0 %v450
    %981 = vmatprep.subr.mxu0 %v449
    %982 = vmatpush2.msra.mxu0 %v448
    %983 = vmatprep.subr.mxu0 %v447
    %984 = vmatpush2.msra.mxu0 %v446
    %985 = vmatprep.subr.mxu0 %v445
    %986 = vmatpush2.msra.mxu0 %v444
    %987 = vmatprep.subr.mxu0 %v443
    %988 = vmatpush2.msra.mxu0 %v442
    %989 = vmatprep.subr.mxu0 %v441
    %990 = vmatpush2.msra.mxu0 %v440
    %991 = vmatprep.subr.mxu0 %v439
    %992 = vmatpush2.msra.mxu0 %v438
    %993 = vmatprep.subr.mxu0 %v437
    %994 = vmatpush2.msra.mxu0 %v436
    %995 = vmatprep.subr.mxu0 %v435
    %996 = vmatpush2.msra.mxu0 %v434
    %997 = vmatprep.subr.mxu0 %v433
    %998 = vmatpush2.msra.mxu0 %v432
    %999 = vmatprep.subr.mxu0 %v431
    %1000 = vmatpush2.msra.mxu0 %v430
    %1001 = vmatprep.subr.mxu0 %v429
    %1002 = vmatpush2.msra.mxu0 %v428
    %1003 = vmatprep.subr.mxu0 %v427
    %1004 = vmatpush2.msra.mxu0 %v426
    %1005 = vmatprep.subr.mxu0 %v425
    %1006 = vmatpush2.msra.mxu0 %v424
    %1007 = vmatprep.subr.mxu0 %v423
    %1008 = vmatpush2.msra.mxu0 %v422
    %1009 = vmatprep.subr.mxu0 %v421
    %1010 = vmatpush2.msra.mxu0 %v420
    %1011 = vmatprep.mubr.f32.mxu0 %v63
    %1012 = vmatmul.mubr.f32.gmra.mxu0 %v62
    %v1013 = vpop.f32.mrf.mxu0
    %v1014 = vadd.f32 %v943, %v1013
    %v1015 = vpop.f32.mrf.mxu0
    %v1016 = vadd.f32 %v945, %v1015
    %1017 = vdwg.mxu0
    %1018 = vmatprep.subr.mxu0 %v483
    %1019 = vmatpush1.msra.mxu0 %v482
    %1020 = vmatprep.subr.mxu0 %v481
    %1021 = vmatpush1.msra.mxu0 %v480
    %1022 = vmatprep.subr.mxu0 %v479
    %1023 = vmatpush1.msra.mxu0 %v478
    %1024 = vmatprep.subr.mxu0 %v477
    %1025 = vmatpush1.msra.mxu0 %v476
    %1026 = vmatprep.subr.mxu0 %v475
    %1027 = vmatpush1.msra.mxu0 %v474
    %1028 = vmatprep.subr.mxu0 %v473
    %1029 = vmatpush1.msra.mxu0 %v472
    %1030 = vmatprep.subr.mxu0 %v471
    %1031 = vmatpush1.msra.mxu0 %v470
    %1032 = vmatprep.subr.mxu0 %v469
    %1033 = vmatpush1.msra.mxu0 %v468
    %1034 = vmatprep.subr.mxu0 %v467
    %1035 = vmatpush1.msra.mxu0 %v466
    %1036 = vmatprep.subr.mxu0 %v465
    %1037 = vmatpush1.msra.mxu0 %v464
    %1038 = vmatprep.subr.mxu0 %v463
    %1039 = vmatpush1.msra.mxu0 %v462
    %1040 = vmatprep.subr.mxu0 %v461
    %1041 = vmatpush1.msra.mxu0 %v460
    %1042 = vmatprep.subr.mxu0 %v459
    %1043 = vmatpush1.msra.mxu0 %v458
    %1044 = vmatprep.subr.mxu0 %v457
    %1045 = vmatpush1.msra.mxu0 %v456
    %1046 = vmatprep.subr.mxu0 %v455
    %1047 = vmatpush1.msra.mxu0 %v454
    %1048 = vmatprep.subr.mxu0 %v453
    %1049 = vmatpush1.msra.mxu0 %v452
    %1050 = vmatprep.subr.mxu0 %v515
    %1051 = vmatpush2.msra.mxu0 %v514
    %1052 = vmatprep.subr.mxu0 %v513
    %1053 = vmatpush2.msra.mxu0 %v512
    %1054 = vmatprep.subr.mxu0 %v511
    %1055 = vmatpush2.msra.mxu0 %v510
    %1056 = vmatprep.subr.mxu0 %v509
    %1057 = vmatpush2.msra.mxu0 %v508
    %1058 = vmatprep.subr.mxu0 %v507
    %1059 = vmatpush2.msra.mxu0 %v506
    %1060 = vmatprep.subr.mxu0 %v505
    %1061 = vmatpush2.msra.mxu0 %v504
    %1062 = vmatprep.subr.mxu0 %v503
    %1063 = vmatpush2.msra.mxu0 %v502
    %1064 = vmatprep.subr.mxu0 %v501
    %1065 = vmatpush2.msra.mxu0 %v500
    %1066 = vmatprep.subr.mxu0 %v499
    %1067 = vmatpush2.msra.mxu0 %v498
    %1068 = vmatprep.subr.mxu0 %v497
    %1069 = vmatpush2.msra.mxu0 %v496
    %1070 = vmatprep.subr.mxu0 %v495
    %1071 = vmatpush2.msra.mxu0 %v494
    %1072 = vmatprep.subr.mxu0 %v493
    %1073 = vmatpush2.msra.mxu0 %v492
    %1074 = vmatprep.subr.mxu0 %v491
    %1075 = vmatpush2.msra.mxu0 %v490
    %1076 = vmatprep.subr.mxu0 %v489
    %1077 = vmatpush2.msra.mxu0 %v488
    %1078 = vmatprep.subr.mxu0 %v487
    %1079 = vmatpush2.msra.mxu0 %v486
    %1080 = vmatprep.subr.mxu0 %v485
    %1081 = vmatpush2.msra.mxu0 %v484
    %1082 = vmatprep.mubr.f32.mxu0 %v65
    %1083 = vmatmul.mubr.f32.gmra.mxu0 %v64
    %v1084 = vpop.f32.mrf.mxu0
    %v1085 = vadd.f32 %v1014, %v1084
    %v1086 = vpop.f32.mrf.mxu0
    %v1087 = vadd.f32 %v1016, %v1086
    %1088 = vdwg.mxu0
    %1089 = vmatprep.subr.mxu0 %v547
    %1090 = vmatpush1.msra.mxu0 %v546
    %1091 = vmatprep.subr.mxu0 %v545
    %1092 = vmatpush1.msra.mxu0 %v544
    %1093 = vmatprep.subr.mxu0 %v543
    %1094 = vmatpush1.msra.mxu0 %v542
    %1095 = vmatprep.subr.mxu0 %v541
    %1096 = vmatpush1.msra.mxu0 %v540
    %1097 = vmatprep.subr.mxu0 %v539
    %1098 = vmatpush1.msra.mxu0 %v538
    %1099 = vmatprep.subr.mxu0 %v537
    %1100 = vmatpush1.msra.mxu0 %v536
    %1101 = vmatprep.subr.mxu0 %v535
    %1102 = vmatpush1.msra.mxu0 %v534
    %1103 = vmatprep.subr.mxu0 %v533
    %1104 = vmatpush1.msra.mxu0 %v532
    %1105 = vmatprep.subr.mxu0 %v531
    %1106 = vmatpush1.msra.mxu0 %v530
    %1107 = vmatprep.subr.mxu0 %v529
    %1108 = vmatpush1.msra.mxu0 %v528
    %1109 = vmatprep.subr.mxu0 %v527
    %1110 = vmatpush1.msra.mxu0 %v526
    %1111 = vmatprep.subr.mxu0 %v525
    %1112 = vmatpush1.msra.mxu0 %v524
    %1113 = vmatprep.subr.mxu0 %v523
    %1114 = vmatpush1.msra.mxu0 %v522
    %1115 = vmatprep.subr.mxu0 %v521
    %1116 = vmatpush1.msra.mxu0 %v520
    %1117 = vmatprep.subr.mxu0 %v519
    %1118 = vmatpush1.msra.mxu0 %v518
    %1119 = vmatprep.subr.mxu0 %v517
    %1120 = vmatpush1.msra.mxu0 %v516
    %1121 = vmatprep.subr.mxu0 %v579
    %1122 = vmatpush2.msra.mxu0 %v578
    %1123 = vmatprep.subr.mxu0 %v577
    %1124 = vmatpush2.msra.mxu0 %v576
    %1125 = vmatprep.subr.mxu0 %v575
    %1126 = vmatpush2.msra.mxu0 %v574
    %1127 = vmatprep.subr.mxu0 %v573
    %1128 = vmatpush2.msra.mxu0 %v572
    %1129 = vmatprep.subr.mxu0 %v571
    %1130 = vmatpush2.msra.mxu0 %v570
    %1131 = vmatprep.subr.mxu0 %v569
    %1132 = vmatpush2.msra.mxu0 %v568
    %1133 = vmatprep.subr.mxu0 %v567
    %1134 = vmatpush2.msra.mxu0 %v566
    %1135 = vmatprep.subr.mxu0 %v565
    %1136 = vmatpush2.msra.mxu0 %v564
    %1137 = vmatprep.subr.mxu0 %v563
    %1138 = vmatpush2.msra.mxu0 %v562
    %1139 = vmatprep.subr.mxu0 %v561
    %1140 = vmatpush2.msra.mxu0 %v560
    %1141 = vmatprep.subr.mxu0 %v559
    %1142 = vmatpush2.msra.mxu0 %v558
    %1143 = vmatprep.subr.mxu0 %v557
    %1144 = vmatpush2.msra.mxu0 %v556
    %1145 = vmatprep.subr.mxu0 %v555
    %1146 = vmatpush2.msra.mxu0 %v554
    %1147 = vmatprep.subr.mxu0 %v553
    %1148 = vmatpush2.msra.mxu0 %v552
    %1149 = vmatprep.subr.mxu0 %v551
    %1150 = vmatpush2.msra.mxu0 %v550
    %1151 = vmatprep.subr.mxu0 %v549
    %1152 = vmatpush2.msra.mxu0 %v548
    %1153 = vmatprep.mubr.f32.mxu0 %v67
    %1154 = vmatmul.mubr.f32.gmra.mxu0 %v66
    %v1155 = vpop.f32.mrf.mxu0
    %v1156 = vadd.f32 %v1085, %v1155
    %v1157 = vpop.f32.mrf.mxu0
    %v1158 = vadd.f32 %v1087, %v1157
    %1159 = vdwg.mxu0
    %v1160 = vmax.f32 %v1156, %v1158
    %1161 = vmax.xlane.f32.xlu0 %v1160
    %v1162 = vpop.xlane.xlu0 %1161
    %v1163 = vsub.f32 %v1156, %v1162
    %v1164 = vsub.f32 %v1158, %v1162
    %v1165 = vmul.f32 %v1163, 1.442695
    %v1166 = vpow.pop %v1165
    %v1167 = vmul.f32 %v1164, 1.442695
    %v1168 = vpow.pop %v1167
    %v1169 = vadd.f32 %v1166, %v1168
    %1170 = vadd.xlane.f32.xlu0 %v1169
    %v1171 = vpop.xlane.xlu0 %1170
    %v1172 = vrcp.pop %v1171
    %v1173 = vmul.f32 %v1166, %v1172
    %v1174 = vmul.f32 %v1168, %v1172
    %1175 = vst [vmem:[#allocation8] sm:$0xff] %v1173
    %1176 = vst [vmem:[#allocation8 + $0x8] sm:$0xff] %v1174
    // Predicated region
    $region26: #{tpu_custom_call.1} parent=1 // pred_check
      _
    $region27: #{tpu_custom_call.1} parent=1 // pred_check_branch
      %1178 = sbr.rel (0) target = $region29
    $region28: #{tpu_custom_call.1} parent=1 // pred_region
      %s1180 = ssub.s32 256, 256
      %1181 = vsyncadd [#allocation4], %s1180
      %s1183 = sshll.u32 [#allocation8], 4
      %s1184 = int_to_ptr.vmem [resolvable:$true] %s1183
      %1186 = dma.vmem_to_hbm [thread:$0]  %s1184, 256, %s3, [#allocation4]
    $region29: #{tpu_custom_call.1} parent=1 // pred_fallthru
      _
    // Predicated region
    $region30: #{tpu_custom_call.1} parent=1 // pred_check
      _
    $region31: #{tpu_custom_call.1} parent=1 // pred_check_branch
      %1188 = sbr.rel (0) target = $region33
    $region32: #{tpu_custom_call.1} parent=1 // pred_region
      %1189 = dma.done [#allocation4], 256
    $region33: #{tpu_custom_call.1} parent=1 // pred_fallthru
      _
    %1190 = vsyncpa [#allocation3], 1
    %1191 = vsyncpa [#allocation6], 1
    %1192 = vsyncpa [#allocation4], 1

</llo_original>
